<compile_context>
chip_gen: v5e
topology: v5e:2x2
jax: 0.10.0
libtpu: 0.0.40
codegen_flags: <defaults>
</compile_context>

<pallas_src>
import functools

import jax
import jax.numpy as jnp
from jax.experimental import pallas as pl
from jax.experimental.pallas import tpu as pltpu

# Small synthetic configuration consistent with the module's __init__.
model_cfg = dict(
    adt_dims=16,
    adt_dims_layer1=32,
    adt_dims_layer2=24,
    latent_dims_input=20,
    latent_dims=8,
    gex_dims=64,
    gex_dims_layer1=56,
    gex_dims_layer2=48,
    gex_dims_layer3=40,
    gex_dims_layer4=36,
    gex_dims_layer5=32,
    gex_dims_layer6=28,
    gex_dims_layer7=24,
)

PAD = 128  # every feature dimension (<= 65) is lane-padded to 128


def _round_up(x, m):
    return ((x + m - 1) // m) * m


# ------------------------- parameter init (PyTorch layout) -------------------------

def _init_linear(key, out_f, in_f):
    """Deterministic PyTorch-style uniform(-1/sqrt(in), 1/sqrt(in)) init. W: [out, in]."""
    kw, kb = jax.random.split(key)
    bound = 1.0 / jnp.sqrt(jnp.float32(in_f))
    w = jax.random.uniform(kw, (out_f, in_f), jnp.float32, -bound, bound)
    b = jax.random.uniform(kb, (out_f,), jnp.float32, -bound, bound)
    return (w, b)


def init_params(seed=0):
    cfg = model_cfg
    layer_dims = {
        'encoder_input_layer_adt': (cfg['adt_dims_layer1'], cfg['adt_dims']),
        'encoder_layer1_adt': (cfg['adt_dims_layer2'], cfg['adt_dims_layer1']),
        'encoder_layer2_adt': (cfg['latent_dims_input'], cfg['adt_dims_layer2']),
        'decoder_layer3_adt': (cfg['latent_dims_input'], cfg['latent_dims']),
        'decoder_layer2_adt': (cfg['adt_dims_layer2'], cfg['latent_dims_input']),
        'decoder_layer1_adt': (cfg['adt_dims_layer1'], cfg['adt_dims_layer2']),
        'decoder_output_layer_adt': (cfg['adt_dims'], cfg['adt_dims_layer1']),
        'encoder_layer_code': (cfg['latent_dims'], cfg['latent_dims_input']),
        'encoder_input_layer_gex': (cfg['gex_dims_layer1'], cfg['gex_dims']),
        'encoder_layer1_gex': (cfg['gex_dims_layer2'], cfg['gex_dims_layer1']),
        'encoder_layer2_gex': (cfg['gex_dims_layer3'], cfg['gex_dims_layer2']),
        'encoder_layer3_gex': (cfg['gex_dims_layer4'], cfg['gex_dims_layer3']),
        'encoder_layer4_gex': (cfg['gex_dims_layer5'], cfg['gex_dims_layer4']),
        'encoder_layer5_gex': (cfg['gex_dims_layer6'], cfg['gex_dims_layer5']),
        'encoder_layer6_gex': (cfg['gex_dims_layer7'], cfg['gex_dims_layer6']),
        'encoder_layer7_gex': (cfg['latent_dims_input'], cfg['gex_dims_layer7']),
        'decoder_layer8_gex': (cfg['latent_dims_input'], cfg['latent_dims']),
        'decoder_layer7_gex': (cfg['gex_dims_layer7'], cfg['latent_dims_input']),
        'decoder_layer6_gex': (cfg['gex_dims_layer6'], cfg['gex_dims_layer7']),
        'decoder_layer5_gex': (cfg['gex_dims_layer5'], cfg['gex_dims_layer6']),
        'decoder_layer4_gex': (cfg['gex_dims_layer4'], cfg['gex_dims_layer5']),
        'decoder_layer3_gex': (cfg['gex_dims_layer3'], cfg['gex_dims_layer4']),
        'decoder_layer2_gex': (cfg['gex_dims_layer2'], cfg['gex_dims_layer3']),
        'decoder_layer1_gex': (cfg['gex_dims_layer1'], cfg['gex_dims_layer2']),
        'decoder_output_layer_gex': (cfg['gex_dims'] + 1, cfg['gex_dims_layer1']),
    }
    root = jax.random.PRNGKey(seed)
    keys = jax.random.split(root, len(layer_dims))
    return {name: _init_linear(k, out_f, in_f)
            for k, (name, (out_f, in_f)) in zip(keys, layer_dims.items())}


# ------------------------- one-time weight packing -------------------------

def _pad2d(x, rows, cols):
    r, c = x.shape
    return jnp.pad(x, ((0, rows - r), (0, cols - c)))


# (layer_name, pre_relu, post_relu) — matches the PyTorch forward exactly.
_ENC_ADT = (
    ('encoder_input_layer_adt', False, True),
    ('encoder_layer1_adt', False, True),
    ('encoder_layer2_adt', False, True),
    ('encoder_layer_code', False, False),
)
_ENC_GEX = (
    ('encoder_input_layer_gex', False, False),   # NOTE: no relu after the GEX input layer
    ('encoder_layer1_gex', False, True),
    ('encoder_layer2_gex', False, True),
    ('encoder_layer3_gex', False, True),
    ('encoder_layer4_gex', False, True),
    ('encoder_layer5_gex', False, True),
    ('encoder_layer6_gex', False, True),
    ('encoder_layer7_gex', False, True),
    ('encoder_layer_code', False, False),
)
_DEC_ADT = (
    ('decoder_layer3_adt', True, True),
    ('decoder_layer2_adt', False, True),
    ('decoder_layer1_adt', False, True),
    ('decoder_output_layer_adt', False, False),
)
_DEC_GEX = (
    ('decoder_layer8_gex', True, True),
    ('decoder_layer7_gex', False, True),
    ('decoder_layer6_gex', False, True),
    ('decoder_layer5_gex', False, True),
    ('decoder_layer4_gex', False, True),
    ('decoder_layer3_gex', False, True),
    ('decoder_layer2_gex', False, True),
    ('decoder_layer1_gex', False, True),
    ('decoder_output_layer_gex', False, False),
)


def pack_branch(params, branch):
    """Pack all layers along one forward path into a single padded, pre-transposed slab.

    Returns (W_slab [L,128,128], B_slab [L,1,128], enc_spec, dec_adt_spec, dec_gex_spec)
    where each spec is a tuple of (slab_index, pre_relu, post_relu) static Python entries.
    """
    enc = _ENC_ADT if branch == 'adt' else _ENC_GEX
    chains = (enc, _DEC_ADT, _DEC_GEX)

    Ws, Bs, specs = [], [], []
    idx = 0
    for chain in chains:
        spec = []
        for (name, pre, post) in chain:
            w, b = params[name]                       # w: [out, in] (PyTorch)
            Ws.append(_pad2d(w.T, PAD, PAD))          # pre-transpose to [in, out], pad
            Bs.append(_pad2d(b.reshape(1, -1), 1, PAD))
            spec.append((idx, bool(pre), bool(post)))
            idx += 1
        specs.append(tuple(spec))

    W_slab = jnp.stack(Ws).astype(jnp.float32)        # (L, 128, 128)
    B_slab = jnp.stack(Bs).astype(jnp.float32)        # (L, 1, 128)
    return (W_slab, B_slab) + tuple(specs)


# ------------------------- fused Pallas kernel -------------------------

def _fused_kernel(x_ref, w_ref, b_ref, code_ref, adt_ref, gex_ref, *,
                  enc_spec, dec_adt_spec, dec_gex_spec, gex_col):
    """Full forward pass for one batch tile; all activations stay in VMEM/vregs."""

    def run_chain(chain, act):
        for (li, pre, post) in chain:                 # static unrolled layer loop
            if pre:
                act = jnp.maximum(act, 0.0)
            act = jnp.dot(act, w_ref[li],
                          preferred_element_type=jnp.float32) + b_ref[li]
            if post:
                act = jnp.maximum(act, 0.0)
        return act

    x = x_ref[...]                                    # (TB, 128) lane-padded input
    code = run_chain(enc_spec, x)
    code_ref[...] = code.astype(code_ref.dtype)

    adt = run_chain(dec_adt_spec, code)
    adt_ref[...] = adt.astype(adt_ref.dtype)

    g = run_chain(dec_gex_spec, code)
    # Fused un_norm_gex epilogue: columns [0, gex_col) * column gex_col.
    # Padding columns of the last layer are zero, so lanes >= gex_col are don't-care
    # (sliced away in the wrapper); a full-width multiply keeps the store lane-dense.
    scale = g[:, gex_col:gex_col + 1]
    gex_ref[...] = (g * scale).astype(gex_ref.dtype)


def run_fused(features, W_slab, B_slab, enc_spec, dec_adt_spec, dec_gex_spec):
    batch, in_dim = features.shape
    L = W_slab.shape[0]
    code_dim = model_cfg['latent_dims']
    adt_dim = model_cfg['adt_dims']
    gex_dim = model_cfg['gex_dims']

    # Batch tiling: sublane-aligned tile, weight-stationary grid over batch.
    TB = min(512, _round_up(max(batch, 1), 8))
    B_pad = _round_up(batch, TB)
    n_tiles = B_pad // TB

    x_pad = jnp.zeros((B_pad, PAD), jnp.float32).at[:batch, :in_dim].set(
        features.astype(jnp.float32))

    kernel = functools.partial(
        _fused_kernel,
        enc_spec=enc_spec,
        dec_adt_spec=dec_adt_spec,
        dec_gex_spec=dec_gex_spec,
        gex_col=gex_dim)

    out_shape = (
        jax.ShapeDtypeStruct((B_pad, PAD), jnp.float32),   # code (padded)
        jax.ShapeDtypeStruct((B_pad, PAD), jnp.float32),   # adt  (padded)
        jax.ShapeDtypeStruct((B_pad, PAD), jnp.float32),   # gex  (padded)
    )

    grid_spec = pltpu.PrefetchScalarGridSpec(
        num_scalar_prefetch=0,
        grid=(n_tiles,),
        in_specs=[
            pl.BlockSpec((TB, PAD), lambda i: (i, 0)),           # activations: tiled
            pl.BlockSpec((L, PAD, PAD), lambda i: (0, 0, 0)),    # weights: VMEM-resident
            pl.BlockSpec((L, 1, PAD), lambda i: (0, 0, 0)),      # biases:  VMEM-resident
        ],
        out_specs=[
            pl.BlockSpec((TB, PAD), lambda i: (i, 0)),
            pl.BlockSpec((TB, PAD), lambda i: (i, 0)),
            pl.BlockSpec((TB, PAD), lambda i: (i, 0)),
        ],
    )

    # Explicit VMEM budget: double-buffered slabs + activation tiles + headroom.
    vmem_bytes = 2 * 4 * (W_slab.size + B_slab.size + 4 * TB * PAD) + (4 << 20)
    vmem_bytes = int(min(vmem_bytes, 32 << 20))

    code_p, adt_p, gex_p = pl.pallas_call(
        kernel,
        out_shape=out_shape,
        grid_spec=grid_spec,
        compiler_params=pltpu.CompilerParams(
            dimension_semantics=("parallel",),      # lets v7x shard batch tiles across TCs
            vmem_limit_bytes=vmem_bytes),
    )(x_pad, W_slab, B_slab)

    return (code_p[:batch, :code_dim],
            adt_p[:batch, :adt_dim],
            gex_p[:batch, :gex_dim])


# ------------------------- model forward (branch dispatch) -------------------------

def forward(packs, features):
    num_dim = features.shape[1]
    if num_dim == model_cfg['adt_dims']:
        pack = packs['adt']
    elif num_dim == model_cfg['gex_dims']:
        pack = packs['gex']
    else:
        # Original module returns the string 'invalid input'; raising at trace time is
        # the jit-safe equivalent.
        raise ValueError('invalid input')
    W_slab, B_slab, enc_spec, dec_adt_spec, dec_gex_spec = pack
    return run_fused(features, W_slab, B_slab, enc_spec, dec_adt_spec, dec_gex_spec)


# ------------------------- pure-JAX reference (for verification) -------------------------

def _ref_linear(x, wb, pre=False, post=False):
    w, b = wb
    if pre:
        x = jnp.maximum(x, 0.0)
    y = jnp.dot(x, w.T, precision=jax.lax.Precision.HIGHEST) + b
    if post:
        y = jnp.maximum(y, 0.0)
    return y


def reference_forward(params, features):
    def chain(spec, act):
        for (name, pre, post) in spec:
            act = _ref_linear(act, params[name], pre, post)
        return act
    enc = _ENC_ADT if features.shape[1] == model_cfg['adt_dims'] else _ENC_GEX
    code = chain(enc, features)
    adt = chain(_DEC_ADT, code)
    g = chain(_DEC_GEX, code)
    gd = model_cfg['gex_dims']
    gex = g[:, :gd] * g[:, gd:gd + 1]
    return code, adt, gex


# ------------------------- main -------------------------

if __name__ == "__main__":
    params = init_params(seed=0)

    # Pack weights ONCE (transpose + pad + stack) for both possible input branches.
    packs = {
        'adt': pack_branch(params, 'adt'),
        'gex': pack_branch(params, 'gex'),
    }

    # ADT-branch input: [batch=2, adt_dims=16]
    x = jax.random.normal(jax.random.PRNGKey(0), (2, model_cfg['adt_dims']), jnp.float32)

    fwd = jax.jit(functools.partial(forward, packs))
    code, out_adt, out_gex = fwd(x)
    jax.block_until_ready((code, out_adt, out_gex))

    assert code.shape == (2, model_cfg['latent_dims'])
    assert out_adt.shape == (2, model_cfg['adt_dims'])
    assert out_gex.shape == (2, model_cfg['gex_dims'])

    # Numerical check against a pure-JAX reference of the same math.
    ref_code, ref_adt, ref_gex = reference_forward(params, x)
    assert jnp.allclose(code, ref_code, rtol=1e-3, atol=1e-3)
    assert jnp.allclose(out_adt, ref_adt, rtol=1e-3, atol=1e-3)
    assert jnp.allclose(out_gex, ref_gex, rtol=1e-3, atol=1e-3)

    print("KERNEL_OK")
</pallas_src>

<mosaic_0001>
module attributes {stable_mosaic.version = 11 : i64} {
  func.func @_fused_kernel(%arg0: i32, %arg1: memref<8x128xf32, #tpu.memory_space<vmem>>, %arg2: memref<17x128x128xf32, #tpu.memory_space<vmem>>, %arg3: memref<17x1x128xf32, #tpu.memory_space<vmem>>, %arg4: memref<8x128xf32, #tpu.memory_space<vmem>>, %arg5: memref<8x128xf32, #tpu.memory_space<vmem>>, %arg6: memref<8x128xf32, #tpu.memory_space<vmem>>) attributes {dimension_semantics = [#tpu.dimension_semantics<parallel>], iteration_bounds = array<i64: 1>, scalar_prefetch = 0 : i64, scratch_operands = 0 : i64, tpu.core_type = #tpu.core_type<tc>, window_params = [{transform_indices = @transform_0, window_bounds = array<i64: 8, 128>}, {pipeline_mode = #tpu.pipeline_mode<synchronous>, transform_indices = @transform_1, window_bounds = array<i64: 17, 128, 128>}, {pipeline_mode = #tpu.pipeline_mode<synchronous>, transform_indices = @transform_2, window_bounds = array<i64: 17, 1, 128>}, {transform_indices = @transform_3, window_bounds = array<i64: 8, 128>}, {transform_indices = @transform_4, window_bounds = array<i64: 8, 128>}, {transform_indices = @transform_5, window_bounds = array<i64: 8, 128>}]} {
    %c0 = arith.constant 0 : index
    %c0_0 = arith.constant 0 : index
    %0 = vector.load %arg1[%c0, %c0_0] : memref<8x128xf32, #tpu.memory_space<vmem>>, vector<8x128xf32>
    %c0_1 = arith.constant 0 : index
    %c0_2 = arith.constant 0 : index
    %c0_3 = arith.constant 0 : index
    %1 = vector.load %arg2[%c0_1, %c0_2, %c0_3] : memref<17x128x128xf32, #tpu.memory_space<vmem>>, vector<1x128x128xf32>
    %2 = vector.shape_cast %1 : vector<1x128x128xf32> to vector<128x128xf32>
    %cst = arith.constant dense<0.000000e+00> : vector<8x128xf32>
    %3 = tpu.matmul %0, %2, %cst {dimension_numbers = #tpu.dot_dimension_numbers<[1], [0], [0], [1], [0, 0, 1, 1], [], []>} : vector<8x128xf32>, vector<128x128xf32>, vector<8x128xf32> -> vector<8x128xf32>
    %c0_4 = arith.constant 0 : index
    %c0_5 = arith.constant 0 : index
    %c0_6 = arith.constant 0 : index
    %4 = vector.load %arg3[%c0_4, %c0_5, %c0_6] : memref<17x1x128xf32, #tpu.memory_space<vmem>>, vector<1x1x128xf32>
    %5 = vector.shape_cast %4 : vector<1x1x128xf32> to vector<1x128xf32>
    %6 = vector.broadcast %5 : vector<1x128xf32> to vector<8x128xf32>
    %7 = arith.addf %3, %6 : vector<8x128xf32>
    %cst_7 = arith.constant 0.000000e+00 : f32
    %8 = vector.broadcast %cst_7 : f32 to vector<8x128xf32>
    %9 = arith.maximumf %7, %8 : vector<8x128xf32>
    %c1 = arith.constant 1 : index
    %c0_8 = arith.constant 0 : index
    %c0_9 = arith.constant 0 : index
    %10 = vector.load %arg2[%c1, %c0_8, %c0_9] : memref<17x128x128xf32, #tpu.memory_space<vmem>>, vector<1x128x128xf32>
    %11 = vector.shape_cast %10 : vector<1x128x128xf32> to vector<128x128xf32>
    %cst_10 = arith.constant dense<0.000000e+00> : vector<8x128xf32>
    %12 = tpu.matmul %9, %11, %cst_10 {dimension_numbers = #tpu.dot_dimension_numbers<[1], [0], [0], [1], [0, 0, 1, 1], [], []>} : vector<8x128xf32>, vector<128x128xf32>, vector<8x128xf32> -> vector<8x128xf32>
    %c1_11 = arith.constant 1 : index
    %c0_12 = arith.constant 0 : index
    %c0_13 = arith.constant 0 : index
    %13 = vector.load %arg3[%c1_11, %c0_12, %c0_13] : memref<17x1x128xf32, #tpu.memory_space<vmem>>, vector<1x1x128xf32>
    %14 = vector.shape_cast %13 : vector<1x1x128xf32> to vector<1x128xf32>
    %15 = vector.broadcast %14 : vector<1x128xf32> to vector<8x128xf32>
    %16 = arith.addf %12, %15 : vector<8x128xf32>
    %cst_14 = arith.constant 0.000000e+00 : f32
    %17 = vector.broadcast %cst_14 : f32 to vector<8x128xf32>
    %18 = arith.maximumf %16, %17 : vector<8x128xf32>
    %c2 = arith.constant 2 : index
    %c0_15 = arith.constant 0 : index
    %c0_16 = arith.constant 0 : index
    %19 = vector.load %arg2[%c2, %c0_15, %c0_16] : memref<17x128x128xf32, #tpu.memory_space<vmem>>, vector<1x128x128xf32>
    %20 = vector.shape_cast %19 : vector<1x128x128xf32> to vector<128x128xf32>
    %cst_17 = arith.constant dense<0.000000e+00> : vector<8x128xf32>
    %21 = tpu.matmul %18, %20, %cst_17 {dimension_numbers = #tpu.dot_dimension_numbers<[1], [0], [0], [1], [0, 0, 1, 1], [], []>} : vector<8x128xf32>, vector<128x128xf32>, vector<8x128xf32> -> vector<8x128xf32>
    %c2_18 = arith.constant 2 : index
    %c0_19 = arith.constant 0 : index
    %c0_20 = arith.constant 0 : index
    %22 = vector.load %arg3[%c2_18, %c0_19, %c0_20] : memref<17x1x128xf32, #tpu.memory_space<vmem>>, vector<1x1x128xf32>
    %23 = vector.shape_cast %22 : vector<1x1x128xf32> to vector<1x128xf32>
    %24 = vector.broadcast %23 : vector<1x128xf32> to vector<8x128xf32>
    %25 = arith.addf %21, %24 : vector<8x128xf32>
    %cst_21 = arith.constant 0.000000e+00 : f32
    %26 = vector.broadcast %cst_21 : f32 to vector<8x128xf32>
    %27 = arith.maximumf %25, %26 : vector<8x128xf32>
    %c3 = arith.constant 3 : index
    %c0_22 = arith.constant 0 : index
    %c0_23 = arith.constant 0 : index
    %28 = vector.load %arg2[%c3, %c0_22, %c0_23] : memref<17x128x128xf32, #tpu.memory_space<vmem>>, vector<1x128x128xf32>
    %29 = vector.shape_cast %28 : vector<1x128x128xf32> to vector<128x128xf32>
    %cst_24 = arith.constant dense<0.000000e+00> : vector<8x128xf32>
    %30 = tpu.matmul %27, %29, %cst_24 {dimension_numbers = #tpu.dot_dimension_numbers<[1], [0], [0], [1], [0, 0, 1, 1], [], []>} : vector<8x128xf32>, vector<128x128xf32>, vector<8x128xf32> -> vector<8x128xf32>
    %c3_25 = arith.constant 3 : index
    %c0_26 = arith.constant 0 : index
    %c0_27 = arith.constant 0 : index
    %31 = vector.load %arg3[%c3_25, %c0_26, %c0_27] : memref<17x1x128xf32, #tpu.memory_space<vmem>>, vector<1x1x128xf32>
    %32 = vector.shape_cast %31 : vector<1x1x128xf32> to vector<1x128xf32>
    %33 = vector.broadcast %32 : vector<1x128xf32> to vector<8x128xf32>
    %34 = arith.addf %30, %33 : vector<8x128xf32>
    %c0_28 = arith.constant 0 : index
    %c0_29 = arith.constant 0 : index
    %35 = vector.load %arg4[%c0_28, %c0_29] : memref<8x128xf32, #tpu.memory_space<vmem>>, vector<8x128xf32>
    tpu.vector_store %arg4[%c0_28, %c0_29], %34 {strides = array<i32>} : memref<8x128xf32, #tpu.memory_space<vmem>>, vector<8x128xf32>,
    %cst_30 = arith.constant 0.000000e+00 : f32
    %36 = vector.broadcast %cst_30 : f32 to vector<8x128xf32>
    %37 = arith.maximumf %34, %36 : vector<8x128xf32>
    %c4 = arith.constant 4 : index
    %c0_31 = arith.constant 0 : index
    %c0_32 = arith.constant 0 : index
    %38 = vector.load %arg2[%c4, %c0_31, %c0_32] : memref<17x128x128xf32, #tpu.memory_space<vmem>>, vector<1x128x128xf32>
    %39 = vector.shape_cast %38 : vector<1x128x128xf32> to vector<128x128xf32>
    %cst_33 = arith.constant dense<0.000000e+00> : vector<8x128xf32>
    %40 = tpu.matmul %37, %39, %cst_33 {dimension_numbers = #tpu.dot_dimension_numbers<[1], [0], [0], [1], [0, 0, 1, 1], [], []>} : vector<8x128xf32>, vector<128x128xf32>, vector<8x128xf32> -> vector<8x128xf32>
    %c4_34 = arith.constant 4 : index
    %c0_35 = arith.constant 0 : index
    %c0_36 = arith.constant 0 : index
    %41 = vector.load %arg3[%c4_34, %c0_35, %c0_36] : memref<17x1x128xf32, #tpu.memory_space<vmem>>, vector<1x1x128xf32>
    %42 = vector.shape_cast %41 : vector<1x1x128xf32> to vector<1x128xf32>
    %43 = vector.broadcast %42 : vector<1x128xf32> to vector<8x128xf32>
    %44 = arith.addf %40, %43 : vector<8x128xf32>
    %cst_37 = arith.constant 0.000000e+00 : f32
    %45 = vector.broadcast %cst_37 : f32 to vector<8x128xf32>
    %46 = arith.maximumf %44, %45 : vector<8x128xf32>
    %c5 = arith.constant 5 : index
    %c0_38 = arith.constant 0 : index
    %c0_39 = arith.constant 0 : index
    %47 = vector.load %arg2[%c5, %c0_38, %c0_39] : memref<17x128x128xf32, #tpu.memory_space<vmem>>, vector<1x128x128xf32>
    %48 = vector.shape_cast %47 : vector<1x128x128xf32> to vector<128x128xf32>
    %cst_40 = arith.constant dense<0.000000e+00> : vector<8x128xf32>
    %49 = tpu.matmul %46, %48, %cst_40 {dimension_numbers = #tpu.dot_dimension_numbers<[1], [0], [0], [1], [0, 0, 1, 1], [], []>} : vector<8x128xf32>, vector<128x128xf32>, vector<8x128xf32> -> vector<8x128xf32>
    %c5_41 = arith.constant 5 : index
    %c0_42 = arith.constant 0 : index
    %c0_43 = arith.constant 0 : index
    %50 = vector.load %arg3[%c5_41, %c0_42, %c0_43] : memref<17x1x128xf32, #tpu.memory_space<vmem>>, vector<1x1x128xf32>
    %51 = vector.shape_cast %50 : vector<1x1x128xf32> to vector<1x128xf32>
    %52 = vector.broadcast %51 : vector<1x128xf32> to vector<8x128xf32>
    %53 = arith.addf %49, %52 : vector<8x128xf32>
    %cst_44 = arith.constant 0.000000e+00 : f32
    %54 = vector.broadcast %cst_44 : f32 to vector<8x128xf32>
    %55 = arith.maximumf %53, %54 : vector<8x128xf32>
    %c6 = arith.constant 6 : index
    %c0_45 = arith.constant 0 : index
    %c0_46 = arith.constant 0 : index
    %56 = vector.load %arg2[%c6, %c0_45, %c0_46] : memref<17x128x128xf32, #tpu.memory_space<vmem>>, vector<1x128x128xf32>
    %57 = vector.shape_cast %56 : vector<1x128x128xf32> to vector<128x128xf32>
    %cst_47 = arith.constant dense<0.000000e+00> : vector<8x128xf32>
    %58 = tpu.matmul %55, %57, %cst_47 {dimension_numbers = #tpu.dot_dimension_numbers<[1], [0], [0], [1], [0, 0, 1, 1], [], []>} : vector<8x128xf32>, vector<128x128xf32>, vector<8x128xf32> -> vector<8x128xf32>
    %c6_48 = arith.constant 6 : index
    %c0_49 = arith.constant 0 : index
    %c0_50 = arith.constant 0 : index
    %59 = vector.load %arg3[%c6_48, %c0_49, %c0_50] : memref<17x1x128xf32, #tpu.memory_space<vmem>>, vector<1x1x128xf32>
    %60 = vector.shape_cast %59 : vector<1x1x128xf32> to vector<1x128xf32>
    %61 = vector.broadcast %60 : vector<1x128xf32> to vector<8x128xf32>
    %62 = arith.addf %58, %61 : vector<8x128xf32>
    %cst_51 = arith.constant 0.000000e+00 : f32
    %63 = vector.broadcast %cst_51 : f32 to vector<8x128xf32>
    %64 = arith.maximumf %62, %63 : vector<8x128xf32>
    %c7 = arith.constant 7 : index
    %c0_52 = arith.constant 0 : index
    %c0_53 = arith.constant 0 : index
    %65 = vector.load %arg2[%c7, %c0_52, %c0_53] : memref<17x128x128xf32, #tpu.memory_space<vmem>>, vector<1x128x128xf32>
    %66 = vector.shape_cast %65 : vector<1x128x128xf32> to vector<128x128xf32>
    %cst_54 = arith.constant dense<0.000000e+00> : vector<8x128xf32>
    %67 = tpu.matmul %64, %66, %cst_54 {dimension_numbers = #tpu.dot_dimension_numbers<[1], [0], [0], [1], [0, 0, 1, 1], [], []>} : vector<8x128xf32>, vector<128x128xf32>, vector<8x128xf32> -> vector<8x128xf32>
    %c7_55 = arith.constant 7 : index
    %c0_56 = arith.constant 0 : index
    %c0_57 = arith.constant 0 : index
    %68 = vector.load %arg3[%c7_55, %c0_56, %c0_57] : memref<17x1x128xf32, #tpu.memory_space<vmem>>, vector<1x1x128xf32>
    %69 = vector.shape_cast %68 : vector<1x1x128xf32> to vector<1x128xf32>
    %70 = vector.broadcast %69 : vector<1x128xf32> to vector<8x128xf32>
    %71 = arith.addf %67, %70 : vector<8x128xf32>
    %c0_58 = arith.constant 0 : index
    %c0_59 = arith.constant 0 : index
    %72 = vector.load %arg5[%c0_58, %c0_59] : memref<8x128xf32, #tpu.memory_space<vmem>>, vector<8x128xf32>
    tpu.vector_store %arg5[%c0_58, %c0_59], %71 {strides = array<i32>} : memref<8x128xf32, #tpu.memory_space<vmem>>, vector<8x128xf32>,
    %cst_60 = arith.constant 0.000000e+00 : f32
    %73 = vector.broadcast %cst_60 : f32 to vector<8x128xf32>
    %74 = arith.maximumf %34, %73 : vector<8x128xf32>
    %c8 = arith.constant 8 : index
    %c0_61 = arith.constant 0 : index
    %c0_62 = arith.constant 0 : index
    %75 = vector.load %arg2[%c8, %c0_61, %c0_62] : memref<17x128x128xf32, #tpu.memory_space<vmem>>, vector<1x128x128xf32>
    %76 = vector.shape_cast %75 : vector<1x128x128xf32> to vector<128x128xf32>
    %cst_63 = arith.constant dense<0.000000e+00> : vector<8x128xf32>
    %77 = tpu.matmul %74, %76, %cst_63 {dimension_numbers = #tpu.dot_dimension_numbers<[1], [0], [0], [1], [0, 0, 1, 1], [], []>} : vector<8x128xf32>, vector<128x128xf32>, vector<8x128xf32> -> vector<8x128xf32>
    %c8_64 = arith.constant 8 : index
    %c0_65 = arith.constant 0 : index
    %c0_66 = arith.constant 0 : index
    %78 = vector.load %arg3[%c8_64, %c0_65, %c0_66] : memref<17x1x128xf32, #tpu.memory_space<vmem>>, vector<1x1x128xf32>
    %79 = vector.shape_cast %78 : vector<1x1x128xf32> to vector<1x128xf32>
    %80 = vector.broadcast %79 : vector<1x128xf32> to vector<8x128xf32>
    %81 = arith.addf %77, %80 : vector<8x128xf32>
    %cst_67 = arith.constant 0.000000e+00 : f32
    %82 = vector.broadcast %cst_67 : f32 to vector<8x128xf32>
    %83 = arith.maximumf %81, %82 : vector<8x128xf32>
    %c9 = arith.constant 9 : index
    %c0_68 = arith.constant 0 : index
    %c0_69 = arith.constant 0 : index
    %84 = vector.load %arg2[%c9, %c0_68, %c0_69] : memref<17x128x128xf32, #tpu.memory_space<vmem>>, vector<1x128x128xf32>
    %85 = vector.shape_cast %84 : vector<1x128x128xf32> to vector<128x128xf32>
    %cst_70 = arith.constant dense<0.000000e+00> : vector<8x128xf32>
    %86 = tpu.matmul %83, %85, %cst_70 {dimension_numbers = #tpu.dot_dimension_numbers<[1], [0], [0], [1], [0, 0, 1, 1], [], []>} : vector<8x128xf32>, vector<128x128xf32>, vector<8x128xf32> -> vector<8x128xf32>
    %c9_71 = arith.constant 9 : index
    %c0_72 = arith.constant 0 : index
    %c0_73 = arith.constant 0 : index
    %87 = vector.load %arg3[%c9_71, %c0_72, %c0_73] : memref<17x1x128xf32, #tpu.memory_space<vmem>>, vector<1x1x128xf32>
    %88 = vector.shape_cast %87 : vector<1x1x128xf32> to vector<1x128xf32>
    %89 = vector.broadcast %88 : vector<1x128xf32> to vector<8x128xf32>
    %90 = arith.addf %86, %89 : vector<8x128xf32>
    %cst_74 = arith.constant 0.000000e+00 : f32
    %91 = vector.broadcast %cst_74 : f32 to vector<8x128xf32>
    %92 = arith.maximumf %90, %91 : vector<8x128xf32>
    %c10 = arith.constant 10 : index
    %c0_75 = arith.constant 0 : index
    %c0_76 = arith.constant 0 : index
    %93 = vector.load %arg2[%c10, %c0_75, %c0_76] : memref<17x128x128xf32, #tpu.memory_space<vmem>>, vector<1x128x128xf32>
    %94 = vector.shape_cast %93 : vector<1x128x128xf32> to vector<128x128xf32>
    %cst_77 = arith.constant dense<0.000000e+00> : vector<8x128xf32>
    %95 = tpu.matmul %92, %94, %cst_77 {dimension_numbers = #tpu.dot_dimension_numbers<[1], [0], [0], [1], [0, 0, 1, 1], [], []>} : vector<8x128xf32>, vector<128x128xf32>, vector<8x128xf32> -> vector<8x128xf32>
    %c10_78 = arith.constant 10 : index
    %c0_79 = arith.constant 0 : index
    %c0_80 = arith.constant 0 : index
    %96 = vector.load %arg3[%c10_78, %c0_79, %c0_80] : memref<17x1x128xf32, #tpu.memory_space<vmem>>, vector<1x1x128xf32>
    %97 = vector.shape_cast %96 : vector<1x1x128xf32> to vector<1x128xf32>
    %98 = vector.broadcast %97 : vector<1x128xf32> to vector<8x128xf32>
    %99 = arith.addf %95, %98 : vector<8x128xf32>
    %cst_81 = arith.constant 0.000000e+00 : f32
    %100 = vector.broadcast %cst_81 : f32 to vector<8x128xf32>
    %101 = arith.maximumf %99, %100 : vector<8x128xf32>
    %c11 = arith.constant 11 : index
    %c0_82 = arith.constant 0 : index
    %c0_83 = arith.constant 0 : index
    %102 = vector.load %arg2[%c11, %c0_82, %c0_83] : memref<17x128x128xf32, #tpu.memory_space<vmem>>, vector<1x128x128xf32>
    %103 = vector.shape_cast %102 : vector<1x128x128xf32> to vector<128x128xf32>
    %cst_84 = arith.constant dense<0.000000e+00> : vector<8x128xf32>
    %104 = tpu.matmul %101, %103, %cst_84 {dimension_numbers = #tpu.dot_dimension_numbers<[1], [0], [0], [1], [0, 0, 1, 1], [], []>} : vector<8x128xf32>, vector<128x128xf32>, vector<8x128xf32> -> vector<8x128xf32>
    %c11_85 = arith.constant 11 : index
    %c0_86 = arith.constant 0 : index
    %c0_87 = arith.constant 0 : index
    %105 = vector.load %arg3[%c11_85, %c0_86, %c0_87] : memref<17x1x128xf32, #tpu.memory_space<vmem>>, vector<1x1x128xf32>
    %106 = vector.shape_cast %105 : vector<1x1x128xf32> to vector<1x128xf32>
    %107 = vector.broadcast %106 : vector<1x128xf32> to vector<8x128xf32>
    %108 = arith.addf %104, %107 : vector<8x128xf32>
    %cst_88 = arith.constant 0.000000e+00 : f32
    %109 = vector.broadcast %cst_88 : f32 to vector<8x128xf32>
    %110 = arith.maximumf %108, %109 : vector<8x128xf32>
    %c12 = arith.constant 12 : index
    %c0_89 = arith.constant 0 : index
    %c0_90 = arith.constant 0 : index
    %111 = vector.load %arg2[%c12, %c0_89, %c0_90] : memref<17x128x128xf32, #tpu.memory_space<vmem>>, vector<1x128x128xf32>
    %112 = vector.shape_cast %111 : vector<1x128x128xf32> to vector<128x128xf32>
    %cst_91 = arith.constant dense<0.000000e+00> : vector<8x128xf32>
    %113 = tpu.matmul %110, %112, %cst_91 {dimension_numbers = #tpu.dot_dimension_numbers<[1], [0], [0], [1], [0, 0, 1, 1], [], []>} : vector<8x128xf32>, vector<128x128xf32>, vector<8x128xf32> -> vector<8x128xf32>
    %c12_92 = arith.constant 12 : index
    %c0_93 = arith.constant 0 : index
    %c0_94 = arith.constant 0 : index
    %114 = vector.load %arg3[%c12_92, %c0_93, %c0_94] : memref<17x1x128xf32, #tpu.memory_space<vmem>>, vector<1x1x128xf32>
    %115 = vector.shape_cast %114 : vector<1x1x128xf32> to vector<1x128xf32>
    %116 = vector.broadcast %115 : vector<1x128xf32> to vector<8x128xf32>
    %117 = arith.addf %113, %116 : vector<8x128xf32>
    %cst_95 = arith.constant 0.000000e+00 : f32
    %118 = vector.broadcast %cst_95 : f32 to vector<8x128xf32>
    %119 = arith.maximumf %117, %118 : vector<8x128xf32>
    %c13 = arith.constant 13 : index
    %c0_96 = arith.constant 0 : index
    %c0_97 = arith.constant 0 : index
    %120 = vector.load %arg2[%c13, %c0_96, %c0_97] : memref<17x128x128xf32, #tpu.memory_space<vmem>>, vector<1x128x128xf32>
    %121 = vector.shape_cast %120 : vector<1x128x128xf32> to vector<128x128xf32>
    %cst_98 = arith.constant dense<0.000000e+00> : vector<8x128xf32>
    %122 = tpu.matmul %119, %121, %cst_98 {dimension_numbers = #tpu.dot_dimension_numbers<[1], [0], [0], [1], [0, 0, 1, 1], [], []>} : vector<8x128xf32>, vector<128x128xf32>, vector<8x128xf32> -> vector<8x128xf32>
    %c13_99 = arith.constant 13 : index
    %c0_100 = arith.constant 0 : index
    %c0_101 = arith.constant 0 : index
    %123 = vector.load %arg3[%c13_99, %c0_100, %c0_101] : memref<17x1x128xf32, #tpu.memory_space<vmem>>, vector<1x1x128xf32>
    %124 = vector.shape_cast %123 : vector<1x1x128xf32> to vector<1x128xf32>
    %125 = vector.broadcast %124 : vector<1x128xf32> to vector<8x128xf32>
    %126 = arith.addf %122, %125 : vector<8x128xf32>
    %cst_102 = arith.constant 0.000000e+00 : f32
    %127 = vector.broadcast %cst_102 : f32 to vector<8x128xf32>
    %128 = arith.maximumf %126, %127 : vector<8x128xf32>
    %c14 = arith.constant 14 : index
    %c0_103 = arith.constant 0 : index
    %c0_104 = arith.constant 0 : index
    %129 = vector.load %arg2[%c14, %c0_103, %c0_104] : memref<17x128x128xf32, #tpu.memory_space<vmem>>, vector<1x128x128xf32>
    %130 = vector.shape_cast %129 : vector<1x128x128xf32> to vector<128x128xf32>
    %cst_105 = arith.constant dense<0.000000e+00> : vector<8x128xf32>
    %131 = tpu.matmul %128, %130, %cst_105 {dimension_numbers = #tpu.dot_dimension_numbers<[1], [0], [0], [1], [0, 0, 1, 1], [], []>} : vector<8x128xf32>, vector<128x128xf32>, vector<8x128xf32> -> vector<8x128xf32>
    %c14_106 = arith.constant 14 : index
    %c0_107 = arith.constant 0 : index
    %c0_108 = arith.constant 0 : index
    %132 = vector.load %arg3[%c14_106, %c0_107, %c0_108] : memref<17x1x128xf32, #tpu.memory_space<vmem>>, vector<1x1x128xf32>
    %133 = vector.shape_cast %132 : vector<1x1x128xf32> to vector<1x128xf32>
    %134 = vector.broadcast %133 : vector<1x128xf32> to vector<8x128xf32>
    %135 = arith.addf %131, %134 : vector<8x128xf32>
    %cst_109 = arith.constant 0.000000e+00 : f32
    %136 = vector.broadcast %cst_109 : f32 to vector<8x128xf32>
    %137 = arith.maximumf %135, %136 : vector<8x128xf32>
    %c15 = arith.constant 15 : index
    %c0_110 = arith.constant 0 : index
    %c0_111 = arith.constant 0 : index
    %138 = vector.load %arg2[%c15, %c0_110, %c0_111] : memref<17x128x128xf32, #tpu.memory_space<vmem>>, vector<1x128x128xf32>
    %139 = vector.shape_cast %138 : vector<1x128x128xf32> to vector<128x128xf32>
    %cst_112 = arith.constant dense<0.000000e+00> : vector<8x128xf32>
    %140 = tpu.matmul %137, %139, %cst_112 {dimension_numbers = #tpu.dot_dimension_numbers<[1], [0], [0], [1], [0, 0, 1, 1], [], []>} : vector<8x128xf32>, vector<128x128xf32>, vector<8x128xf32> -> vector<8x128xf32>
    %c15_113 = arith.constant 15 : index
    %c0_114 = arith.constant 0 : index
    %c0_115 = arith.constant 0 : index
    %141 = vector.load %arg3[%c15_113, %c0_114, %c0_115] : memref<17x1x128xf32, #tpu.memory_space<vmem>>, vector<1x1x128xf32>
    %142 = vector.shape_cast %141 : vector<1x1x128xf32> to vector<1x128xf32>
    %143 = vector.broadcast %142 : vector<1x128xf32> to vector<8x128xf32>
    %144 = arith.addf %140, %143 : vector<8x128xf32>
    %cst_116 = arith.constant 0.000000e+00 : f32
    %145 = vector.broadcast %cst_116 : f32 to vector<8x128xf32>
    %146 = arith.maximumf %144, %145 : vector<8x128xf32>
    %c16 = arith.constant 16 : index
    %c0_117 = arith.constant 0 : index
    %c0_118 = arith.constant 0 : index
    %147 = vector.load %arg2[%c16, %c0_117, %c0_118] : memref<17x128x128xf32, #tpu.memory_space<vmem>>, vector<1x128x128xf32>
    %148 = vector.shape_cast %147 : vector<1x128x128xf32> to vector<128x128xf32>
    %cst_119 = arith.constant dense<0.000000e+00> : vector<8x128xf32>
    %149 = tpu.matmul %146, %148, %cst_119 {dimension_numbers = #tpu.dot_dimension_numbers<[1], [0], [0], [1], [0, 0, 1, 1], [], []>} : vector<8x128xf32>, vector<128x128xf32>, vector<8x128xf32> -> vector<8x128xf32>
    %c16_120 = arith.constant 16 : index
    %c0_121 = arith.constant 0 : index
    %c0_122 = arith.constant 0 : index
    %150 = vector.load %arg3[%c16_120, %c0_121, %c0_122] : memref<17x1x128xf32, #tpu.memory_space<vmem>>, vector<1x1x128xf32>
    %151 = vector.shape_cast %150 : vector<1x1x128xf32> to vector<1x128xf32>
    %152 = vector.broadcast %151 : vector<1x128xf32> to vector<8x128xf32>
    %153 = arith.addf %149, %152 : vector<8x128xf32>
    %154 = vector.extract_strided_slice %153 {offsets = [0, 64], sizes = [8, 1], strides = [1, 1]} : vector<8x128xf32> to vector<8x1xf32>
    %155 = vector.broadcast %154 : vector<8x1xf32> to vector<8x128xf32>
    %156 = arith.mulf %153, %155 : vector<8x128xf32>
    %c0_123 = arith.constant 0 : index
    %c0_124 = arith.constant 0 : index
    %157 = vector.load %arg6[%c0_123, %c0_124] : memref<8x128xf32, #tpu.memory_space<vmem>>, vector<8x128xf32>
    tpu.vector_store %arg6[%c0_123, %c0_124], %156 {strides = array<i32>} : memref<8x128xf32, #tpu.memory_space<vmem>>, vector<8x128xf32>,
    return
  }
  func.func @transform_0(%arg0: i32) -> (i32, i32) {
    %c0_i32 = arith.constant 0 : i32
    %c0_i32_0 = arith.constant 0 : i32
    return %arg0, %c0_i32 : i32, i32
  }
  func.func @transform_1(%arg0: i32) -> (i32, i32, i32) {
    %c0_i32 = arith.constant 0 : i32
    %c0_i32_0 = arith.constant 0 : i32
    %c0_i32_1 = arith.constant 0 : i32
    %c0_i32_2 = arith.constant 0 : i32
    return %c0_i32, %c0_i32_0, %c0_i32_1 : i32, i32, i32
  }
  func.func @transform_2(%arg0: i32) -> (i32, i32, i32) {
    %c0_i32 = arith.constant 0 : i32
    %c0_i32_0 = arith.constant 0 : i32
    %c0_i32_1 = arith.constant 0 : i32
    %c0_i32_2 = arith.constant 0 : i32
    return %c0_i32, %c0_i32_0, %c0_i32_1 : i32, i32, i32
  }
  func.func @transform_3(%arg0: i32) -> (i32, i32) {
    %c0_i32 = arith.constant 0 : i32
    %c0_i32_0 = arith.constant 0 : i32
    return %arg0, %c0_i32 : i32, i32
  }
  func.func @transform_4(%arg0: i32) -> (i32, i32) {
    %c0_i32 = arith.constant 0 : i32
    %c0_i32_0 = arith.constant 0 : i32
    return %arg0, %c0_i32 : i32, i32
  }
  func.func @transform_5(%arg0: i32) -> (i32, i32) {
    %c0_i32 = arith.constant 0 : i32
    %c0_i32_0 = arith.constant 0 : i32
    return %arg0, %c0_i32 : i32, i32
  }
}

</mosaic_0001>

<llo_original>
// kernel: forward.1
$region0: #{forward.1}
  #allocation0 [shape = 'u32[]', space=smem, size = 0x4, offset = 0x4, fixed_abs, tag = 'smem constant byte address 0x4 - core index']
  #allocation1 [shape = 'u32[72,128]{1,0:T(1,128)}', space=vmem, size = 0x9000, scoped, tag = 'internal scratch']
  %s0 = inlined_call_operand.vmem [shape: f32[8,128], index: 0, kind: input, shape index: {}]
  %s1 = inlined_call_operand.hbm [shape: f32[17,128,128], index: 1, kind: input, shape index: {}]
  %s2 = inlined_call_operand.hbm [shape: f32[17,1,128], index: 2, kind: input, shape index: {}]
  %s3 = inlined_call_operand.vmem [shape: f32[8,128], index: 3, kind: output, shape index: {0}]
  %s4 = inlined_call_operand.vmem [shape: f32[8,128], index: 4, kind: output, shape index: {1}]
  %s5 = inlined_call_operand.vmem [shape: f32[8,128], index: 5, kind: output, shape index: {2}]
  %6 = xla_tuple %s3, %s4, %s5
  %s7 = sld [smem:[#allocation0]]
  $region46: #{forward.1} parent=0
    _
  %s9 = ssub.s32 1, %s7
  %s10 = scalar_select 0, %s9, %s7
  $region1: #{forward.1} parent=0
    #allocation2 [shape = 'u8[1114112]{0}', space=vmem, size = 0x110000, scoped, tag = 'input window, operand 1, single buffered']
    #allocation3 [shape = 's32[1]{0}', space=sflag, size = 0x4, scoped, tag = 'scoped memory for forward.1']
    #allocation4 [shape = 'u8[8704]{0}', space=vmem, size = 0x2400, scoped, tag = 'input window, operand 2, single buffered']
    #allocation5 [shape = 's32[1]{0}', space=sflag, size = 0x4, scoped, tag = 'scoped memory for forward.1']
    %11 = vsyncpa [#allocation3], 0
    %12 = vsyncpa [#allocation5], 0
    // Predicated region
    $region2: #{forward.1} parent=1 // pred_check
      _
    $region3: #{forward.1} parent=1 // pred_check_branch
      %14 = sbr.rel (0) target = $region5
    $region4: #{forward.1} parent=1 // pred_region
      _
    $region5: #{forward.1} parent=1 // pred_fallthru
      _
    // Predicated region
    $region6: #{forward.1} parent=1 // pred_check
      _
    $region7: #{forward.1} parent=1 // pred_check_branch
      %16 = sbr.rel (0) target = $region9
    $region8: #{forward.1} parent=1 // pred_region
      %18 = vsyncadd [#allocation3], 0
      %s19 = sshll.u32 %s1, 4
      %s20 = int_to_ptr.hbm [resolvable:$true] %s19
      %s21 = sshll.u32 [#allocation2], 4
      %s22 = int_to_ptr.vmem [resolvable:$true] %s21
      %27 = dma.hbm_to_vmem [thread:$0]  %s20, 34816, %s22, [#allocation3], 128, 128, 8
    $region9: #{forward.1} parent=1 // pred_fallthru
      _
    // Predicated region
    $region10: #{forward.1} parent=1 // pred_check
      _
    $region11: #{forward.1} parent=1 // pred_check_branch
      %29 = sbr.rel (0) target = $region13
    $region12: #{forward.1} parent=1 // pred_region
      %31 = vsyncadd [#allocation5], 0
      %s32 = sshll.u32 %s2, 4
      %s33 = int_to_ptr.hbm [resolvable:$true] %s32
      %s34 = sshll.u32 [#allocation4], 4
      %s35 = int_to_ptr.vmem [resolvable:$true] %s34
      %40 = dma.hbm_to_vmem [thread:$0]  %s33, 272, %s35, [#allocation5], 16, 16, 1
    $region13: #{forward.1} parent=1 // pred_fallthru
      _
    // Predicated region
    $region14: #{forward.1} parent=1 // pred_check
      _
    $region15: #{forward.1} parent=1 // pred_check_branch
      %42 = sbr.rel (0) target = $region17
    $region16: #{forward.1} parent=1 // pred_region
      %44 = dma.done [#allocation3], 34816
    $region17: #{forward.1} parent=1 // pred_fallthru
      _
    // Predicated region
    $region18: #{forward.1} parent=1 // pred_check
      _
    $region19: #{forward.1} parent=1 // pred_check_branch
      %46 = sbr.rel (0) target = $region21
    $region20: #{forward.1} parent=1 // pred_region
      %48 = dma.done [#allocation5], 272
    $region21: #{forward.1} parent=1 // pred_fallthru
      _
    %v49 = vld [vmem:[%s0] sm:$0xff]
    %v50 = vld [vmem:[#allocation2] sm:$0xff]
    %v51 = vld [vmem:[#allocation2 + $0x8] sm:$0xff]
    %v52 = vld [vmem:[#allocation2 + $0x10] sm:$0xff]
    %v53 = vld [vmem:[#allocation2 + $0x18] sm:$0xff]
    %v54 = vld [vmem:[#allocation2 + $0x20] sm:$0xff]
    %v55 = vld [vmem:[#allocation2 + $0x28] sm:$0xff]
    %v56 = vld [vmem:[#allocation2 + $0x30] sm:$0xff]
    %v57 = vld [vmem:[#allocation2 + $0x38] sm:$0xff]
    %v58 = vld [vmem:[#allocation2 + $0x40] sm:$0xff]
    %v59 = vld [vmem:[#allocation2 + $0x48] sm:$0xff]
    %v60 = vld [vmem:[#allocation2 + $0x50] sm:$0xff]
    %v61 = vld [vmem:[#allocation2 + $0x58] sm:$0xff]
    %v62 = vld [vmem:[#allocation2 + $0x60] sm:$0xff]
    %v63 = vld [vmem:[#allocation2 + $0x68] sm:$0xff]
    %v64 = vld [vmem:[#allocation2 + $0x70] sm:$0xff]
    %v65 = vld [vmem:[#allocation2 + $0x78] sm:$0xff]
    %v66 = vld [vmem:[#allocation4] sm:$0x1]
    %v68 = vperm.slane %v66, 0
    %70 = vmatpush.msra.mxu0 %v65
    %71 = vmatpush.msra.mxu0 %v64
    %72 = vmatpush.msra.mxu0 %v63
    %73 = vmatpush.msra.mxu0 %v62
    %74 = vmatpush.msra.mxu0 %v61
    %75 = vmatpush.msra.mxu0 %v60
    %76 = vmatpush.msra.mxu0 %v59
    %77 = vmatpush.msra.mxu0 %v58
    %78 = vmatpush.msra.mxu0 %v57
    %79 = vmatpush.msra.mxu0 %v56
    %80 = vmatpush.msra.mxu0 %v55
    %81 = vmatpush.msra.mxu0 %v54
    %82 = vmatpush.msra.mxu0 %v53
    %83 = vmatpush.msra.mxu0 %v52
    %84 = vmatpush.msra.mxu0 %v51
    %85 = vmatpush.msra.mxu0 %v50
    %86 = vmatmul.f32.gmra.mxu0 %v49
    %v87 = vpop.f32.mrf.mxu0
    %v88 = vadd.f32 %v68, %v87
    %89 = vdwg.mxu0
    %v90 = vmax.f32 %v88, 0.0
    %s91 = scalar_lea.vmem [#allocation2], 128
    %v92 = vld [vmem:[%s91] sm:$0xff]
    %v93 = vld [vmem:[%s91 + $0x8] sm:$0xff]
    %v94 = vld [vmem:[%s91 + $0x10] sm:$0xff]
    %v95 = vld [vmem:[%s91 + $0x18] sm:$0xff]
    %v96 = vld [vmem:[%s91 + $0x20] sm:$0xff]
    %v97 = vld [vmem:[%s91 + $0x28] sm:$0xff]
    %v98 = vld [vmem:[%s91 + $0x30] sm:$0xff]
    %v99 = vld [vmem:[%s91 + $0x38] sm:$0xff]
    %v100 = vld [vmem:[%s91 + $0x40] sm:$0xff]
    %v101 = vld [vmem:[%s91 + $0x48] sm:$0xff]
    %v102 = vld [vmem:[%s91 + $0x50] sm:$0xff]
    %v103 = vld [vmem:[%s91 + $0x58] sm:$0xff]
    %v104 = vld [vmem:[%s91 + $0x60] sm:$0xff]
    %v105 = vld [vmem:[%s91 + $0x68] sm:$0xff]
    %v106 = vld [vmem:[%s91 + $0x70] sm:$0xff]
    %v107 = vld [vmem:[%s91 + $0x78] sm:$0xff]
    %s108 = scalar_lea.vmem [#allocation4], 1
    %v109 = vld [vmem:[%s108] sm:$0x1]
    %v111 = vperm.slane %v109, 0
    %113 = vmatpush.msra.mxu0 %v107
    %114 = vmatpush.msra.mxu0 %v106
    %115 = vmatpush.msra.mxu0 %v105
    %116 = vmatpush.msra.mxu0 %v104
    %117 = vmatpush.msra.mxu0 %v103
    %118 = vmatpush.msra.mxu0 %v102
    %119 = vmatpush.msra.mxu0 %v101
    %120 = vmatpush.msra.mxu0 %v100
    %121 = vmatpush.msra.mxu0 %v99
    %122 = vmatpush.msra.mxu0 %v98
    %123 = vmatpush.msra.mxu0 %v97
    %124 = vmatpush.msra.mxu0 %v96
    %125 = vmatpush.msra.mxu0 %v95
    %126 = vmatpush.msra.mxu0 %v94
    %127 = vmatpush.msra.mxu0 %v93
    %128 = vmatpush.msra.mxu0 %v92
    %129 = vmatmul.f32.gmra.mxu0 %v90
    %v130 = vpop.f32.mrf.mxu0
    %v131 = vadd.f32 %v111, %v130
    %132 = vdwg.mxu0
    %v133 = vmax.f32 %v131, 0.0
    %s134 = scalar_lea.vmem [#allocation2], 256
    %v135 = vld [vmem:[%s134] sm:$0xff]
    %v136 = vld [vmem:[%s134 + $0x8] sm:$0xff]
    %v137 = vld [vmem:[%s134 + $0x10] sm:$0xff]
    %v138 = vld [vmem:[%s134 + $0x18] sm:$0xff]
    %v139 = vld [vmem:[%s134 + $0x20] sm:$0xff]
    %v140 = vld [vmem:[%s134 + $0x28] sm:$0xff]
    %v141 = vld [vmem:[%s134 + $0x30] sm:$0xff]
    %v142 = vld [vmem:[%s134 + $0x38] sm:$0xff]
    %v143 = vld [vmem:[%s134 + $0x40] sm:$0xff]
    %v144 = vld [vmem:[%s134 + $0x48] sm:$0xff]
    %v145 = vld [vmem:[%s134 + $0x50] sm:$0xff]
    %v146 = vld [vmem:[%s134 + $0x58] sm:$0xff]
    %v147 = vld [vmem:[%s134 + $0x60] sm:$0xff]
    %v148 = vld [vmem:[%s134 + $0x68] sm:$0xff]
    %v149 = vld [vmem:[%s134 + $0x70] sm:$0xff]
    %v150 = vld [vmem:[%s134 + $0x78] sm:$0xff]
    %s151 = scalar_lea.vmem [#allocation4], 2
    %v152 = vld [vmem:[%s151] sm:$0x1]
    %v154 = vperm.slane %v152, 0
    %156 = vmatpush.msra.mxu0 %v150
    %157 = vmatpush.msra.mxu0 %v149
    %158 = vmatpush.msra.mxu0 %v148
    %159 = vmatpush.msra.mxu0 %v147
    %160 = vmatpush.msra.mxu0 %v146
    %161 = vmatpush.msra.mxu0 %v145
    %162 = vmatpush.msra.mxu0 %v144
    %163 = vmatpush.msra.mxu0 %v143
    %164 = vmatpush.msra.mxu0 %v142
    %165 = vmatpush.msra.mxu0 %v141
    %166 = vmatpush.msra.mxu0 %v140
    %167 = vmatpush.msra.mxu0 %v139
    %168 = vmatpush.msra.mxu0 %v138
    %169 = vmatpush.msra.mxu0 %v137
    %170 = vmatpush.msra.mxu0 %v136
    %171 = vmatpush.msra.mxu0 %v135
    %172 = vmatmul.f32.gmra.mxu0 %v133
    %v173 = vpop.f32.mrf.mxu0
    %v174 = vadd.f32 %v154, %v173
    %175 = vdwg.mxu0
    %v176 = vmax.f32 %v174, 0.0
    %s177 = scalar_lea.vmem [#allocation2], 384
    %v178 = vld [vmem:[%s177] sm:$0xff]
    %v179 = vld [vmem:[%s177 + $0x8] sm:$0xff]
    %v180 = vld [vmem:[%s177 + $0x10] sm:$0xff]
    %v181 = vld [vmem:[%s177 + $0x18] sm:$0xff]
    %v182 = vld [vmem:[%s177 + $0x20] sm:$0xff]
    %v183 = vld [vmem:[%s177 + $0x28] sm:$0xff]
    %v184 = vld [vmem:[%s177 + $0x30] sm:$0xff]
    %v185 = vld [vmem:[%s177 + $0x38] sm:$0xff]
    %v186 = vld [vmem:[%s177 + $0x40] sm:$0xff]
    %v187 = vld [vmem:[%s177 + $0x48] sm:$0xff]
    %v188 = vld [vmem:[%s177 + $0x50] sm:$0xff]
    %v189 = vld [vmem:[%s177 + $0x58] sm:$0xff]
    %v190 = vld [vmem:[%s177 + $0x60] sm:$0xff]
    %v191 = vld [vmem:[%s177 + $0x68] sm:$0xff]
    %v192 = vld [vmem:[%s177 + $0x70] sm:$0xff]
    %v193 = vld [vmem:[%s177 + $0x78] sm:$0xff]
    %s194 = scalar_lea.vmem [#allocation4], 3
    %v195 = vld [vmem:[%s194] sm:$0x1]
    %v197 = vperm.slane %v195, 0
    %199 = vmatpush.msra.mxu0 %v193
    %200 = vmatpush.msra.mxu0 %v192
    %201 = vmatpush.msra.mxu0 %v191
    %202 = vmatpush.msra.mxu0 %v190
    %203 = vmatpush.msra.mxu0 %v189
    %204 = vmatpush.msra.mxu0 %v188
    %205 = vmatpush.msra.mxu0 %v187
    %206 = vmatpush.msra.mxu0 %v186
    %207 = vmatpush.msra.mxu0 %v185
    %208 = vmatpush.msra.mxu0 %v184
    %209 = vmatpush.msra.mxu0 %v183
    %210 = vmatpush.msra.mxu0 %v182
    %211 = vmatpush.msra.mxu0 %v181
    %212 = vmatpush.msra.mxu0 %v180
    %213 = vmatpush.msra.mxu0 %v179
    %214 = vmatpush.msra.mxu0 %v178
    %215 = vmatmul.f32.gmra.mxu0 %v176
    %v216 = vpop.f32.mrf.mxu0
    %v217 = vadd.f32 %v197, %v216
    %218 = vdwg.mxu0
    %219 = vst [vmem:[%s3] sm:$0xff] %v217
    %v220 = vmax.f32 %v217, 0.0
    %s221 = scalar_lea.vmem [#allocation2], 512
    %v222 = vld [vmem:[%s221] sm:$0xff]
    %v223 = vld [vmem:[%s221 + $0x8] sm:$0xff]
    %v224 = vld [vmem:[%s221 + $0x10] sm:$0xff]
    %v225 = vld [vmem:[%s221 + $0x18] sm:$0xff]
    %v226 = vld [vmem:[%s221 + $0x20] sm:$0xff]
    %v227 = vld [vmem:[%s221 + $0x28] sm:$0xff]
    %v228 = vld [vmem:[%s221 + $0x30] sm:$0xff]
    %v229 = vld [vmem:[%s221 + $0x38] sm:$0xff]
    %v230 = vld [vmem:[%s221 + $0x40] sm:$0xff]
    %v231 = vld [vmem:[%s221 + $0x48] sm:$0xff]
    %v232 = vld [vmem:[%s221 + $0x50] sm:$0xff]
    %v233 = vld [vmem:[%s221 + $0x58] sm:$0xff]
    %v234 = vld [vmem:[%s221 + $0x60] sm:$0xff]
    %v235 = vld [vmem:[%s221 + $0x68] sm:$0xff]
    %v236 = vld [vmem:[%s221 + $0x70] sm:$0xff]
    %v237 = vld [vmem:[%s221 + $0x78] sm:$0xff]
    %s238 = scalar_lea.vmem [#allocation4], 4
    %v239 = vld [vmem:[%s238] sm:$0x1]
    %v241 = vperm.slane %v239, 0
    %243 = vmatpush.msra.mxu0 %v237
    %244 = vmatpush.msra.mxu0 %v236
    %245 = vmatpush.msra.mxu0 %v235
    %246 = vmatpush.msra.mxu0 %v234
    %247 = vmatpush.msra.mxu0 %v233
    %248 = vmatpush.msra.mxu0 %v232
    %249 = vmatpush.msra.mxu0 %v231
    %250 = vmatpush.msra.mxu0 %v230
    %251 = vmatpush.msra.mxu0 %v229
    %252 = vmatpush.msra.mxu0 %v228
    %253 = vmatpush.msra.mxu0 %v227
    %254 = vmatpush.msra.mxu0 %v226
    %255 = vmatpush.msra.mxu0 %v225
    %256 = vmatpush.msra.mxu0 %v224
    %257 = vmatpush.msra.mxu0 %v223
    %258 = vmatpush.msra.mxu0 %v222
    %259 = vmatmul.f32.gmra.mxu0 %v220
    %v260 = vpop.f32.mrf.mxu0
    %v261 = vadd.f32 %v241, %v260
    %262 = vdwg.mxu0
    %v263 = vmax.f32 %v261, 0.0
    %s264 = scalar_lea.vmem [#allocation2], 640
    %v265 = vld [vmem:[%s264] sm:$0xff]
    %v266 = vld [vmem:[%s264 + $0x8] sm:$0xff]
    %v267 = vld [vmem:[%s264 + $0x10] sm:$0xff]
    %v268 = vld [vmem:[%s264 + $0x18] sm:$0xff]
    %v269 = vld [vmem:[%s264 + $0x20] sm:$0xff]
    %v270 = vld [vmem:[%s264 + $0x28] sm:$0xff]
    %v271 = vld [vmem:[%s264 + $0x30] sm:$0xff]
    %v272 = vld [vmem:[%s264 + $0x38] sm:$0xff]
    %v273 = vld [vmem:[%s264 + $0x40] sm:$0xff]
    %v274 = vld [vmem:[%s264 + $0x48] sm:$0xff]
    %v275 = vld [vmem:[%s264 + $0x50] sm:$0xff]
    %v276 = vld [vmem:[%s264 + $0x58] sm:$0xff]
    %v277 = vld [vmem:[%s264 + $0x60] sm:$0xff]
    %v278 = vld [vmem:[%s264 + $0x68] sm:$0xff]
    %v279 = vld [vmem:[%s264 + $0x70] sm:$0xff]
    %v280 = vld [vmem:[%s264 + $0x78] sm:$0xff]
    %s281 = scalar_lea.vmem [#allocation4], 5
    %v282 = vld [vmem:[%s281] sm:$0x1]
    %v284 = vperm.slane %v282, 0
    %286 = vmatpush.msra.mxu0 %v280
    %287 = vmatpush.msra.mxu0 %v279
    %288 = vmatpush.msra.mxu0 %v278
    %289 = vmatpush.msra.mxu0 %v277
    %290 = vmatpush.msra.mxu0 %v276
    %291 = vmatpush.msra.mxu0 %v275
    %292 = vmatpush.msra.mxu0 %v274
    %293 = vmatpush.msra.mxu0 %v273
    %294 = vmatpush.msra.mxu0 %v272
    %295 = vmatpush.msra.mxu0 %v271
    %296 = vmatpush.msra.mxu0 %v270
    %297 = vmatpush.msra.mxu0 %v269
    %298 = vmatpush.msra.mxu0 %v268
    %299 = vmatpush.msra.mxu0 %v267
    %300 = vmatpush.msra.mxu0 %v266
    %301 = vmatpush.msra.mxu0 %v265
    %302 = vmatmul.f32.gmra.mxu0 %v263
    %v303 = vpop.f32.mrf.mxu0
    %v304 = vadd.f32 %v284, %v303
    %305 = vdwg.mxu0
    %v306 = vmax.f32 %v304, 0.0
    %s307 = scalar_lea.vmem [#allocation2], 768
    %v308 = vld [vmem:[%s307] sm:$0xff]
    %v309 = vld [vmem:[%s307 + $0x8] sm:$0xff]
    %v310 = vld [vmem:[%s307 + $0x10] sm:$0xff]
    %v311 = vld [vmem:[%s307 + $0x18] sm:$0xff]
    %v312 = vld [vmem:[%s307 + $0x20] sm:$0xff]
    %v313 = vld [vmem:[%s307 + $0x28] sm:$0xff]
    %v314 = vld [vmem:[%s307 + $0x30] sm:$0xff]
    %v315 = vld [vmem:[%s307 + $0x38] sm:$0xff]
    %v316 = vld [vmem:[%s307 + $0x40] sm:$0xff]
    %v317 = vld [vmem:[%s307 + $0x48] sm:$0xff]
    %v318 = vld [vmem:[%s307 + $0x50] sm:$0xff]
    %v319 = vld [vmem:[%s307 + $0x58] sm:$0xff]
    %v320 = vld [vmem:[%s307 + $0x60] sm:$0xff]
    %v321 = vld [vmem:[%s307 + $0x68] sm:$0xff]
    %v322 = vld [vmem:[%s307 + $0x70] sm:$0xff]
    %v323 = vld [vmem:[%s307 + $0x78] sm:$0xff]
    %s324 = scalar_lea.vmem [#allocation4], 6
    %v325 = vld [vmem:[%s324] sm:$0x1]
    %v327 = vperm.slane %v325, 0
    %329 = vmatpush.msra.mxu0 %v323
    %330 = vmatpush.msra.mxu0 %v322
    %331 = vmatpush.msra.mxu0 %v321
    %332 = vmatpush.msra.mxu0 %v320
    %333 = vmatpush.msra.mxu0 %v319
    %334 = vmatpush.msra.mxu0 %v318
    %335 = vmatpush.msra.mxu0 %v317
    %336 = vmatpush.msra.mxu0 %v316
    %337 = vmatpush.msra.mxu0 %v315
    %338 = vmatpush.msra.mxu0 %v314
    %339 = vmatpush.msra.mxu0 %v313
    %340 = vmatpush.msra.mxu0 %v312
    %341 = vmatpush.msra.mxu0 %v311
    %342 = vmatpush.msra.mxu0 %v310
    %343 = vmatpush.msra.mxu0 %v309
    %344 = vmatpush.msra.mxu0 %v308
    %345 = vmatmul.f32.gmra.mxu0 %v306
    %v346 = vpop.f32.mrf.mxu0
    %v347 = vadd.f32 %v327, %v346
    %348 = vdwg.mxu0
    %v349 = vmax.f32 %v347, 0.0
    %s350 = scalar_lea.vmem [#allocation2], 896
    %v351 = vld [vmem:[%s350] sm:$0xff]
    %v352 = vld [vmem:[%s350 + $0x8] sm:$0xff]
    %v353 = vld [vmem:[%s350 + $0x10] sm:$0xff]
    %v354 = vld [vmem:[%s350 + $0x18] sm:$0xff]
    %v355 = vld [vmem:[%s350 + $0x20] sm:$0xff]
    %v356 = vld [vmem:[%s350 + $0x28] sm:$0xff]
    %v357 = vld [vmem:[%s350 + $0x30] sm:$0xff]
    %v358 = vld [vmem:[%s350 + $0x38] sm:$0xff]
    %v359 = vld [vmem:[%s350 + $0x40] sm:$0xff]
    %v360 = vld [vmem:[%s350 + $0x48] sm:$0xff]
    %v361 = vld [vmem:[%s350 + $0x50] sm:$0xff]
    %v362 = vld [vmem:[%s350 + $0x58] sm:$0xff]
    %v363 = vld [vmem:[%s350 + $0x60] sm:$0xff]
    %v364 = vld [vmem:[%s350 + $0x68] sm:$0xff]
    %v365 = vld [vmem:[%s350 + $0x70] sm:$0xff]
    %v366 = vld [vmem:[%s350 + $0x78] sm:$0xff]
    %s367 = scalar_lea.vmem [#allocation4], 7
    %v368 = vld [vmem:[%s367] sm:$0x1]
    %v370 = vperm.slane %v368, 0
    %372 = vmatpush.msra.mxu0 %v366
    %373 = vmatpush.msra.mxu0 %v365
    %374 = vmatpush.msra.mxu0 %v364
    %375 = vmatpush.msra.mxu0 %v363
    %376 = vmatpush.msra.mxu0 %v362
    %377 = vmatpush.msra.mxu0 %v361
    %378 = vmatpush.msra.mxu0 %v360
    %379 = vmatpush.msra.mxu0 %v359
    %380 = vmatpush.msra.mxu0 %v358
    %381 = vmatpush.msra.mxu0 %v357
    %382 = vmatpush.msra.mxu0 %v356
    %383 = vmatpush.msra.mxu0 %v355
    %384 = vmatpush.msra.mxu0 %v354
    %385 = vmatpush.msra.mxu0 %v353
    %386 = vmatpush.msra.mxu0 %v352
    %387 = vmatpush.msra.mxu0 %v351
    %388 = vmatmul.f32.gmra.mxu0 %v349
    %v389 = vpop.f32.mrf.mxu0
    %v390 = vadd.f32 %v370, %v389
    %391 = vdwg.mxu0
    %392 = vst [vmem:[%s4] sm:$0xff] %v390
    %s393 = scalar_lea.vmem [#allocation2], 1024
    %v394 = vld [vmem:[%s393] sm:$0xff]
    %v395 = vld [vmem:[%s393 + $0x8] sm:$0xff]
    %v396 = vld [vmem:[%s393 + $0x10] sm:$0xff]
    %v397 = vld [vmem:[%s393 + $0x18] sm:$0xff]
    %v398 = vld [vmem:[%s393 + $0x20] sm:$0xff]
    %v399 = vld [vmem:[%s393 + $0x28] sm:$0xff]
    %v400 = vld [vmem:[%s393 + $0x30] sm:$0xff]
    %v401 = vld [vmem:[%s393 + $0x38] sm:$0xff]
    %v402 = vld [vmem:[%s393 + $0x40] sm:$0xff]
    %v403 = vld [vmem:[%s393 + $0x48] sm:$0xff]
    %v404 = vld [vmem:[%s393 + $0x50] sm:$0xff]
    %v405 = vld [vmem:[%s393 + $0x58] sm:$0xff]
    %v406 = vld [vmem:[%s393 + $0x60] sm:$0xff]
    %v407 = vld [vmem:[%s393 + $0x68] sm:$0xff]
    %v408 = vld [vmem:[%s393 + $0x70] sm:$0xff]
    %v409 = vld [vmem:[%s393 + $0x78] sm:$0xff]
    %s410 = scalar_lea.vmem [#allocation4], 8
    %v411 = vld [vmem:[%s410] sm:$0x1]
    %v413 = vperm.slane %v411, 0
    %415 = vmatpush.msra.mxu0 %v409
    %416 = vmatpush.msra.mxu0 %v408
    %417 = vmatpush.msra.mxu0 %v407
    %418 = vmatpush.msra.mxu0 %v406
    %419 = vmatpush.msra.mxu0 %v405
    %420 = vmatpush.msra.mxu0 %v404
    %421 = vmatpush.msra.mxu0 %v403
    %422 = vmatpush.msra.mxu0 %v402
    %423 = vmatpush.msra.mxu0 %v401
    %424 = vmatpush.msra.mxu0 %v400
    %425 = vmatpush.msra.mxu0 %v399
    %426 = vmatpush.msra.mxu0 %v398
    %427 = vmatpush.msra.mxu0 %v397
    %428 = vmatpush.msra.mxu0 %v396
    %429 = vmatpush.msra.mxu0 %v395
    %430 = vmatpush.msra.mxu0 %v394
    %431 = vmatmul.f32.gmra.mxu0 %v220
    %v432 = vpop.f32.mrf.mxu0
    %v433 = vadd.f32 %v413, %v432
    %434 = vdwg.mxu0
    %v435 = vmax.f32 %v433, 0.0
    %s436 = scalar_lea.vmem [#allocation2], 1152
    %v437 = vld [vmem:[%s436] sm:$0xff]
    %v438 = vld [vmem:[%s436 + $0x8] sm:$0xff]
    %v439 = vld [vmem:[%s436 + $0x10] sm:$0xff]
    %v440 = vld [vmem:[%s436 + $0x18] sm:$0xff]
    %v441 = vld [vmem:[%s436 + $0x20] sm:$0xff]
    %v442 = vld [vmem:[%s436 + $0x28] sm:$0xff]
    %v443 = vld [vmem:[%s436 + $0x30] sm:$0xff]
    %v444 = vld [vmem:[%s436 + $0x38] sm:$0xff]
    %v445 = vld [vmem:[%s436 + $0x40] sm:$0xff]
    %v446 = vld [vmem:[%s436 + $0x48] sm:$0xff]
    %v447 = vld [vmem:[%s436 + $0x50] sm:$0xff]
    %v448 = vld [vmem:[%s436 + $0x58] sm:$0xff]
    %v449 = vld [vmem:[%s436 + $0x60] sm:$0xff]
    %v450 = vld [vmem:[%s436 + $0x68] sm:$0xff]
    %v451 = vld [vmem:[%s436 + $0x70] sm:$0xff]
    %v452 = vld [vmem:[%s436 + $0x78] sm:$0xff]
    %s453 = scalar_lea.vmem [#allocation4], 9
    %v454 = vld [vmem:[%s453] sm:$0x1]
    %v456 = vperm.slane %v454, 0
    %458 = vmatpush.msra.mxu0 %v452
    %459 = vmatpush.msra.mxu0 %v451
    %460 = vmatpush.msra.mxu0 %v450
    %461 = vmatpush.msra.mxu0 %v449
    %462 = vmatpush.msra.mxu0 %v448
    %463 = vmatpush.msra.mxu0 %v447
    %464 = vmatpush.msra.mxu0 %v446
    %465 = vmatpush.msra.mxu0 %v445
    %466 = vmatpush.msra.mxu0 %v444
    %467 = vmatpush.msra.mxu0 %v443
    %468 = vmatpush.msra.mxu0 %v442
    %469 = vmatpush.msra.mxu0 %v441
    %470 = vmatpush.msra.mxu0 %v440
    %471 = vmatpush.msra.mxu0 %v439
    %472 = vmatpush.msra.mxu0 %v438
    %473 = vmatpush.msra.mxu0 %v437
    %474 = vmatmul.f32.gmra.mxu0 %v435
    %v475 = vpop.f32.mrf.mxu0
    %v476 = vadd.f32 %v456, %v475
    %477 = vdwg.mxu0
    %v478 = vmax.f32 %v476, 0.0
    %s479 = scalar_lea.vmem [#allocation2], 1280
    %v480 = vld [vmem:[%s479] sm:$0xff]
    %v481 = vld [vmem:[%s479 + $0x8] sm:$0xff]
    %v482 = vld [vmem:[%s479 + $0x10] sm:$0xff]
    %v483 = vld [vmem:[%s479 + $0x18] sm:$0xff]
    %v484 = vld [vmem:[%s479 + $0x20] sm:$0xff]
    %v485 = vld [vmem:[%s479 + $0x28] sm:$0xff]
    %v486 = vld [vmem:[%s479 + $0x30] sm:$0xff]
    %v487 = vld [vmem:[%s479 + $0x38] sm:$0xff]
    %v488 = vld [vmem:[%s479 + $0x40] sm:$0xff]
    %v489 = vld [vmem:[%s479 + $0x48] sm:$0xff]
    %v490 = vld [vmem:[%s479 + $0x50] sm:$0xff]
    %v491 = vld [vmem:[%s479 + $0x58] sm:$0xff]
    %v492 = vld [vmem:[%s479 + $0x60] sm:$0xff]
    %v493 = vld [vmem:[%s479 + $0x68] sm:$0xff]
    %v494 = vld [vmem:[%s479 + $0x70] sm:$0xff]
    %v495 = vld [vmem:[%s479 + $0x78] sm:$0xff]
    %s496 = scalar_lea.vmem [#allocation4], 10
    %v497 = vld [vmem:[%s496] sm:$0x1]
    %v499 = vperm.slane %v497, 0
    %501 = vmatpush.msra.mxu0 %v495
    %502 = vmatpush.msra.mxu0 %v494
    %503 = vmatpush.msra.mxu0 %v493
    %504 = vmatpush.msra.mxu0 %v492
    %505 = vmatpush.msra.mxu0 %v491
    %506 = vmatpush.msra.mxu0 %v490
    %507 = vmatpush.msra.mxu0 %v489
    %508 = vmatpush.msra.mxu0 %v488
    %509 = vmatpush.msra.mxu0 %v487
    %510 = vmatpush.msra.mxu0 %v486
    %511 = vmatpush.msra.mxu0 %v485
    %512 = vmatpush.msra.mxu0 %v484
    %513 = vmatpush.msra.mxu0 %v483
    %514 = vmatpush.msra.mxu0 %v482
    %515 = vmatpush.msra.mxu0 %v481
    %516 = vmatpush.msra.mxu0 %v480
    %517 = vmatmul.f32.gmra.mxu0 %v478
    %v518 = vpop.f32.mrf.mxu0
    %v519 = vadd.f32 %v499, %v518
    %520 = vdwg.mxu0
    %v521 = vmax.f32 %v519, 0.0
    %s522 = scalar_lea.vmem [#allocation2], 1408
    %v523 = vld [vmem:[%s522] sm:$0xff]
    %v524 = vld [vmem:[%s522 + $0x8] sm:$0xff]
    %v525 = vld [vmem:[%s522 + $0x10] sm:$0xff]
    %v526 = vld [vmem:[%s522 + $0x18] sm:$0xff]
    %v527 = vld [vmem:[%s522 + $0x20] sm:$0xff]
    %v528 = vld [vmem:[%s522 + $0x28] sm:$0xff]
    %v529 = vld [vmem:[%s522 + $0x30] sm:$0xff]
    %v530 = vld [vmem:[%s522 + $0x38] sm:$0xff]
    %v531 = vld [vmem:[%s522 + $0x40] sm:$0xff]
    %v532 = vld [vmem:[%s522 + $0x48] sm:$0xff]
    %v533 = vld [vmem:[%s522 + $0x50] sm:$0xff]
    %v534 = vld [vmem:[%s522 + $0x58] sm:$0xff]
    %v535 = vld [vmem:[%s522 + $0x60] sm:$0xff]
    %v536 = vld [vmem:[%s522 + $0x68] sm:$0xff]
    %v537 = vld [vmem:[%s522 + $0x70] sm:$0xff]
    %v538 = vld [vmem:[%s522 + $0x78] sm:$0xff]
    %s539 = scalar_lea.vmem [#allocation4], 11
    %v540 = vld [vmem:[%s539] sm:$0x1]
    %v542 = vperm.slane %v540, 0
    %544 = vmatpush.msra.mxu0 %v538
    %545 = vmatpush.msra.mxu0 %v537
    %546 = vmatpush.msra.mxu0 %v536
    %547 = vmatpush.msra.mxu0 %v535
    %548 = vmatpush.msra.mxu0 %v534
    %549 = vmatpush.msra.mxu0 %v533
    %550 = vmatpush.msra.mxu0 %v532
    %551 = vmatpush.msra.mxu0 %v531
    %552 = vmatpush.msra.mxu0 %v530
    %553 = vmatpush.msra.mxu0 %v529
    %554 = vmatpush.msra.mxu0 %v528
    %555 = vmatpush.msra.mxu0 %v527
    %556 = vmatpush.msra.mxu0 %v526
    %557 = vmatpush.msra.mxu0 %v525
    %558 = vmatpush.msra.mxu0 %v524
    %559 = vmatpush.msra.mxu0 %v523
    %560 = vmatmul.f32.gmra.mxu0 %v521
    %v561 = vpop.f32.mrf.mxu0
    %v562 = vadd.f32 %v542, %v561
    %563 = vdwg.mxu0
    %v564 = vmax.f32 %v562, 0.0
    %s565 = scalar_lea.vmem [#allocation2], 1536
    %v566 = vld [vmem:[%s565] sm:$0xff]
    %v567 = vld [vmem:[%s565 + $0x8] sm:$0xff]
    %v568 = vld [vmem:[%s565 + $0x10] sm:$0xff]
    %v569 = vld [vmem:[%s565 + $0x18] sm:$0xff]
    %v570 = vld [vmem:[%s565 + $0x20] sm:$0xff]
    %v571 = vld [vmem:[%s565 + $0x28] sm:$0xff]
    %v572 = vld [vmem:[%s565 + $0x30] sm:$0xff]
    %v573 = vld [vmem:[%s565 + $0x38] sm:$0xff]
    %v574 = vld [vmem:[%s565 + $0x40] sm:$0xff]
    %v575 = vld [vmem:[%s565 + $0x48] sm:$0xff]
    %v576 = vld [vmem:[%s565 + $0x50] sm:$0xff]
    %v577 = vld [vmem:[%s565 + $0x58] sm:$0xff]
    %v578 = vld [vmem:[%s565 + $0x60] sm:$0xff]
    %v579 = vld [vmem:[%s565 + $0x68] sm:$0xff]
    %v580 = vld [vmem:[%s565 + $0x70] sm:$0xff]
    %v581 = vld [vmem:[%s565 + $0x78] sm:$0xff]
    %s582 = scalar_lea.vmem [#allocation4], 12
    %v583 = vld [vmem:[%s582] sm:$0x1]
    %v585 = vperm.slane %v583, 0
    %587 = vmatpush.msra.mxu0 %v581
    %588 = vmatpush.msra.mxu0 %v580
    %589 = vmatpush.msra.mxu0 %v579
    %590 = vmatpush.msra.mxu0 %v578
    %591 = vmatpush.msra.mxu0 %v577
    %592 = vmatpush.msra.mxu0 %v576
    %593 = vmatpush.msra.mxu0 %v575
    %594 = vmatpush.msra.mxu0 %v574
    %595 = vmatpush.msra.mxu0 %v573
    %596 = vmatpush.msra.mxu0 %v572
    %597 = vmatpush.msra.mxu0 %v571
    %598 = vmatpush.msra.mxu0 %v570
    %599 = vmatpush.msra.mxu0 %v569
    %600 = vmatpush.msra.mxu0 %v568
    %601 = vmatpush.msra.mxu0 %v567
    %602 = vmatpush.msra.mxu0 %v566
    %603 = vmatmul.f32.gmra.mxu0 %v564
    %v604 = vpop.f32.mrf.mxu0
    %v605 = vadd.f32 %v585, %v604
    %606 = vdwg.mxu0
    %v607 = vmax.f32 %v605, 0.0
    %s608 = scalar_lea.vmem [#allocation2], 1664
    %v609 = vld [vmem:[%s608] sm:$0xff]
    %v610 = vld [vmem:[%s608 + $0x8] sm:$0xff]
    %v611 = vld [vmem:[%s608 + $0x10] sm:$0xff]
    %v612 = vld [vmem:[%s608 + $0x18] sm:$0xff]
    %v613 = vld [vmem:[%s608 + $0x20] sm:$0xff]
    %v614 = vld [vmem:[%s608 + $0x28] sm:$0xff]
    %v615 = vld [vmem:[%s608 + $0x30] sm:$0xff]
    %v616 = vld [vmem:[%s608 + $0x38] sm:$0xff]
    %v617 = vld [vmem:[%s608 + $0x40] sm:$0xff]
    %v618 = vld [vmem:[%s608 + $0x48] sm:$0xff]
    %v619 = vld [vmem:[%s608 + $0x50] sm:$0xff]
    %v620 = vld [vmem:[%s608 + $0x58] sm:$0xff]
    %v621 = vld [vmem:[%s608 + $0x60] sm:$0xff]
    %v622 = vld [vmem:[%s608 + $0x68] sm:$0xff]
    %v623 = vld [vmem:[%s608 + $0x70] sm:$0xff]
    %v624 = vld [vmem:[%s608 + $0x78] sm:$0xff]
    %s625 = scalar_lea.vmem [#allocation4], 13
    %v626 = vld [vmem:[%s625] sm:$0x1]
    %v628 = vperm.slane %v626, 0
    %630 = vmatpush.msra.mxu0 %v624
    %631 = vmatpush.msra.mxu0 %v623
    %632 = vmatpush.msra.mxu0 %v622
    %633 = vmatpush.msra.mxu0 %v621
    %634 = vmatpush.msra.mxu0 %v620
    %635 = vmatpush.msra.mxu0 %v619
    %636 = vmatpush.msra.mxu0 %v618
    %637 = vmatpush.msra.mxu0 %v617
    %638 = vmatpush.msra.mxu0 %v616
    %639 = vmatpush.msra.mxu0 %v615
    %640 = vmatpush.msra.mxu0 %v614
    %641 = vmatpush.msra.mxu0 %v613
    %642 = vmatpush.msra.mxu0 %v612
    %643 = vmatpush.msra.mxu0 %v611
    %644 = vmatpush.msra.mxu0 %v610
    %645 = vmatpush.msra.mxu0 %v609
    %646 = vmatmul.f32.gmra.mxu0 %v607
    %v647 = vpop.f32.mrf.mxu0
    %v648 = vadd.f32 %v628, %v647
    %649 = vdwg.mxu0
    %v650 = vmax.f32 %v648, 0.0
    %s651 = scalar_lea.vmem [#allocation2], 1792
    %v652 = vld [vmem:[%s651] sm:$0xff]
    %v653 = vld [vmem:[%s651 + $0x8] sm:$0xff]
    %v654 = vld [vmem:[%s651 + $0x10] sm:$0xff]
    %v655 = vld [vmem:[%s651 + $0x18] sm:$0xff]
    %v656 = vld [vmem:[%s651 + $0x20] sm:$0xff]
    %v657 = vld [vmem:[%s651 + $0x28] sm:$0xff]
    %v658 = vld [vmem:[%s651 + $0x30] sm:$0xff]
    %v659 = vld [vmem:[%s651 + $0x38] sm:$0xff]
    %v660 = vld [vmem:[%s651 + $0x40] sm:$0xff]
    %v661 = vld [vmem:[%s651 + $0x48] sm:$0xff]
    %v662 = vld [vmem:[%s651 + $0x50] sm:$0xff]
    %v663 = vld [vmem:[%s651 + $0x58] sm:$0xff]
    %v664 = vld [vmem:[%s651 + $0x60] sm:$0xff]
    %v665 = vld [vmem:[%s651 + $0x68] sm:$0xff]
    %v666 = vld [vmem:[%s651 + $0x70] sm:$0xff]
    %v667 = vld [vmem:[%s651 + $0x78] sm:$0xff]
    %s668 = scalar_lea.vmem [#allocation4], 14
    %v669 = vld [vmem:[%s668] sm:$0x1]
    %v671 = vperm.slane %v669, 0
    %673 = vmatpush.msra.mxu0 %v667
    %674 = vmatpush.msra.mxu0 %v666
    %675 = vmatpush.msra.mxu0 %v665
    %676 = vmatpush.msra.mxu0 %v664
    %677 = vmatpush.msra.mxu0 %v663
    %678 = vmatpush.msra.mxu0 %v662
    %679 = vmatpush.msra.mxu0 %v661
    %680 = vmatpush.msra.mxu0 %v660
    %681 = vmatpush.msra.mxu0 %v659
    %682 = vmatpush.msra.mxu0 %v658
    %683 = vmatpush.msra.mxu0 %v657
    %684 = vmatpush.msra.mxu0 %v656
    %685 = vmatpush.msra.mxu0 %v655
    %686 = vmatpush.msra.mxu0 %v654
    %687 = vmatpush.msra.mxu0 %v653
    %688 = vmatpush.msra.mxu0 %v652
    %689 = vmatmul.f32.gmra.mxu0 %v650
    %v690 = vpop.f32.mrf.mxu0
    %v691 = vadd.f32 %v671, %v690
    %692 = vdwg.mxu0
    %v693 = vmax.f32 %v691, 0.0
    %s694 = scalar_lea.vmem [#allocation2], 1920
    %v695 = vld [vmem:[%s694] sm:$0xff]
    %v696 = vld [vmem:[%s694 + $0x8] sm:$0xff]
    %v697 = vld [vmem:[%s694 + $0x10] sm:$0xff]
    %v698 = vld [vmem:[%s694 + $0x18] sm:$0xff]
    %v699 = vld [vmem:[%s694 + $0x20] sm:$0xff]
    %v700 = vld [vmem:[%s694 + $0x28] sm:$0xff]
    %v701 = vld [vmem:[%s694 + $0x30] sm:$0xff]
    %v702 = vld [vmem:[%s694 + $0x38] sm:$0xff]
    %v703 = vld [vmem:[%s694 + $0x40] sm:$0xff]
    %v704 = vld [vmem:[%s694 + $0x48] sm:$0xff]
    %v705 = vld [vmem:[%s694 + $0x50] sm:$0xff]
    %v706 = vld [vmem:[%s694 + $0x58] sm:$0xff]
    %v707 = vld [vmem:[%s694 + $0x60] sm:$0xff]
    %v708 = vld [vmem:[%s694 + $0x68] sm:$0xff]
    %v709 = vld [vmem:[%s694 + $0x70] sm:$0xff]
    %v710 = vld [vmem:[%s694 + $0x78] sm:$0xff]
    %s711 = scalar_lea.vmem [#allocation4], 15
    %v712 = vld [vmem:[%s711] sm:$0x1]
    %v714 = vperm.slane %v712, 0
    %716 = vmatpush.msra.mxu0 %v710
    %717 = vmatpush.msra.mxu0 %v709
    %718 = vmatpush.msra.mxu0 %v708
    %719 = vmatpush.msra.mxu0 %v707
    %720 = vmatpush.msra.mxu0 %v706
    %721 = vmatpush.msra.mxu0 %v705
    %722 = vmatpush.msra.mxu0 %v704
    %723 = vmatpush.msra.mxu0 %v703
    %724 = vmatpush.msra.mxu0 %v702
    %725 = vmatpush.msra.mxu0 %v701
    %726 = vmatpush.msra.mxu0 %v700
    %727 = vmatpush.msra.mxu0 %v699
    %728 = vmatpush.msra.mxu0 %v698
    %729 = vmatpush.msra.mxu0 %v697
    %730 = vmatpush.msra.mxu0 %v696
    %731 = vmatpush.msra.mxu0 %v695
    %732 = vmatmul.f32.gmra.mxu0 %v693
    %v733 = vpop.f32.mrf.mxu0
    %v734 = vadd.f32 %v714, %v733
    %735 = vdwg.mxu0
    %v736 = vmax.f32 %v734, 0.0
    %s737 = scalar_lea.vmem [#allocation2], 2048
    %v738 = vld [vmem:[%s737] sm:$0xff]
    %v739 = vld [vmem:[%s737 + $0x8] sm:$0xff]
    %v740 = vld [vmem:[%s737 + $0x10] sm:$0xff]
    %v741 = vld [vmem:[%s737 + $0x18] sm:$0xff]
    %v742 = vld [vmem:[%s737 + $0x20] sm:$0xff]
    %v743 = vld [vmem:[%s737 + $0x28] sm:$0xff]
    %v744 = vld [vmem:[%s737 + $0x30] sm:$0xff]
    %v745 = vld [vmem:[%s737 + $0x38] sm:$0xff]
    %v746 = vld [vmem:[%s737 + $0x40] sm:$0xff]
    %v747 = vld [vmem:[%s737 + $0x48] sm:$0xff]
    %v748 = vld [vmem:[%s737 + $0x50] sm:$0xff]
    %v749 = vld [vmem:[%s737 + $0x58] sm:$0xff]
    %v750 = vld [vmem:[%s737 + $0x60] sm:$0xff]
    %v751 = vld [vmem:[%s737 + $0x68] sm:$0xff]
    %v752 = vld [vmem:[%s737 + $0x70] sm:$0xff]
    %v753 = vld [vmem:[%s737 + $0x78] sm:$0xff]
    %s754 = scalar_lea.vmem [#allocation4], 16
    %v755 = vld [vmem:[%s754] sm:$0x1]
    %v757 = vperm.slane %v755, 0
    %759 = vmatpush.msra.mxu0 %v753
    %760 = vmatpush.msra.mxu0 %v752
    %761 = vmatpush.msra.mxu0 %v751
    %762 = vmatpush.msra.mxu0 %v750
    %763 = vmatpush.msra.mxu0 %v749
    %764 = vmatpush.msra.mxu0 %v748
    %765 = vmatpush.msra.mxu0 %v747
    %766 = vmatpush.msra.mxu0 %v746
    %767 = vmatpush.msra.mxu0 %v745
    %768 = vmatpush.msra.mxu0 %v744
    %769 = vmatpush.msra.mxu0 %v743
    %770 = vmatpush.msra.mxu0 %v742
    %771 = vmatpush.msra.mxu0 %v741
    %772 = vmatpush.msra.mxu0 %v740
    %773 = vmatpush.msra.mxu0 %v739
    %774 = vmatpush.msra.mxu0 %v738
    %775 = vmatmul.f32.gmra.mxu0 %v736
    %v776 = vpop.f32.mrf.mxu0
    %v777 = vadd.f32 %v757, %v776
    %778 = vdwg.mxu0
    %780 = vset.pattern.permute.xlu0 64
    %781 = vperm.xlu0 %780, %v777
    %v782 = vpop.permute.xlu0 %781
    %v784 = vmul.f32 %v777, %v782
    %785 = vst [vmem:[%s5] sm:$0xff] %v784
    // Predicated region
    $region22: #{forward.1} parent=1 // pred_check
      _
    $region23: #{forward.1} parent=1 // pred_check_branch
      %787 = sbr.rel (0) target = $region25
    $region24: #{forward.1} parent=1 // pred_region
      _
    $region25: #{forward.1} parent=1 // pred_fallthru
      _
    // Predicated region
    $region26: #{forward.1} parent=1 // pred_check
      _
    $region27: #{forward.1} parent=1 // pred_check_branch
      %789 = sbr.rel (0) target = $region29
    $region28: #{forward.1} parent=1 // pred_region
      _
    $region29: #{forward.1} parent=1 // pred_fallthru
      _
    // Predicated region
    $region30: #{forward.1} parent=1 // pred_check
      _
    $region31: #{forward.1} parent=1 // pred_check_branch
      %791 = sbr.rel (0) target = $region33
    $region32: #{forward.1} parent=1 // pred_region
      _
    $region33: #{forward.1} parent=1 // pred_fallthru
      _
    // Predicated region
    $region34: #{forward.1} parent=1 // pred_check
      _
    $region35: #{forward.1} parent=1 // pred_check_branch
      %793 = sbr.rel (0) target = $region37
    $region36: #{forward.1} parent=1 // pred_region
      _
    $region37: #{forward.1} parent=1 // pred_fallthru
      _
    // Predicated region
    $region38: #{forward.1} parent=1 // pred_check
      _
    $region39: #{forward.1} parent=1 // pred_check_branch
      %795 = sbr.rel (0) target = $region41
    $region40: #{forward.1} parent=1 // pred_region
      _
    $region41: #{forward.1} parent=1 // pred_fallthru
      _
    // Predicated region
    $region42: #{forward.1} parent=1 // pred_check
      _
    $region43: #{forward.1} parent=1 // pred_check_branch
      %797 = sbr.rel (0) target = $region45
    $region44: #{forward.1} parent=1 // pred_region
      _
    $region45: #{forward.1} parent=1 // pred_fallthru
      _
    %798 = vsyncpa [#allocation3], 1
    %799 = vsyncpa [#allocation5], 1

</llo_original>
